<compile_context>
chip_gen: v5e
topology: v5e:2x2
jax: 0.10.0
libtpu: 0.0.40
codegen_flags: <defaults>
</compile_context>

<pallas_src>
import functools
import math

import numpy as np
import jax
import jax.numpy as jnp
from jax import lax
from jax.experimental import pallas as pl
from jax.experimental.pallas import tpu as pltpu

BN_EPS = 1e-5  # torch.nn.BatchNorm2d default


def _conv1xk(h, w_ref, b_ref, mask_ref, offsets, C):
    """Dilated (1, K) conv along the flattened spatial (lane) axis.

    h:        (C, S) f32 input; S = rows * W (row-aligned block)
    w_ref:    (C, K*C) VMEM ref, w[co, k*C + ci] = torch_w[co, ci, 0, k]
    b_ref:    (C, 1) VMEM ref (bias)
    mask_ref: (K, S) VMEM ref of 0/1 tap-validity masks
    """
    S = h.shape[-1]
    acc = jnp.zeros((C, S), jnp.float32)
    for k, o in enumerate(offsets):
        if o == 0:
            tap = h
        else:
            # Shift along lanes (lowers to lane rotates) and zero taps that
            # would cross a row boundary / fall into the conv zero padding.
            tap = jnp.roll(h, -o, axis=-1) * mask_ref[k:k + 1, :]
        for ci in range(C):
            row = tap[ci:ci + 1, :]                        # (1, S)
            wcol = w_ref[:, k * C + ci:k * C + ci + 1]     # (C, 1)
            acc = acc + wcol * row                         # broadcast VPU FMA
    return acc + b_ref[...]


def _resblock_kernel(x_ref, scale_ref, shift_ref, w1_ref, b1_ref, w2_ref,
                     b2_ref, mask_ref, out_ref, *, offsets):
    C, _ = x_ref.shape
    x = x_ref[...].astype(jnp.float32)

    # BatchNorm2d (train mode); per-channel scale/shift precomputed in wrapper.
    xn = x * scale_ref[...] + shift_ref[...]               # (C, S) — identity

    h1 = jnp.maximum(_conv1xk(xn, w1_ref, b1_ref, mask_ref, offsets, C), 0.0)
    y = _conv1xk(h1, w2_ref, b2_ref, mask_ref, offsets, C) + xn
    out_ref[...] = jnp.maximum(y, 0.0).astype(out_ref.dtype)


def _spatial_block(H, W, target=4096):
    """Row-aligned spatial block size: multiple of W and (if tiled) of 128."""
    HW = H * W
    if HW <= target:
        return HW
    step = (W * 128) // math.gcd(W, 128)   # lcm(W, 128)
    blk = (target // step) * step
    while blk >= step:
        if HW % blk == 0:
            return blk
        blk -= step
    return HW


@functools.partial(jax.jit, static_argnames=("kernel_size", "dilation"))
def resblock_forward(x_nchw, params, *, kernel_size, dilation):
    # residual add requires conv output width == input width => kernel_size == 3
    assert kernel_size == 3, "ResBlock residual add only shape-checks for kernel_size=3"
    N, C, H, W = x_nchw.shape
    d = dilation
    K = kernel_size
    HW = H * W
    S_BLK = _spatial_block(H, W)
    assert S_BLK % W == 0 and HW % S_BLK == 0

    # NCHW -> (N, C, H*W): contiguous reshape only (no transpose round trip).
    x_flat = x_nchw.reshape(N, C, HW)

    # BN training-mode batch stats (biased variance), hoisted as a tiny XLA
    # reduction so grid tiles are independent.
    # TODO(synk): running_mean/running_var side-effect updates are not modeled.
    mean = jnp.mean(x_nchw, axis=(0, 2, 3))
    var = jnp.var(x_nchw, axis=(0, 2, 3))
    inv = lax.rsqrt(var + BN_EPS)
    scale = (params['gamma'] * inv).astype(jnp.float32).reshape(C, 1)
    shift = (params['beta'] - mean * params['gamma'] * inv
             ).astype(jnp.float32).reshape(C, 1)

    # Tap offsets along W: o_k = k*d - d (conv padding == dilation).
    offsets = tuple(k * d - d for k in range(K))
    # 0/1 validity mask per tap over one spatial block. Blocks are row-aligned,
    # so the same tiled per-row mask applies to every block.
    cols = np.arange(W)
    masks = np.stack(
        [np.tile(((cols + o) >= 0) & ((cols + o) < W), S_BLK // W)
         for o in offsets]).astype(np.float32)               # (K, S_BLK)
    masks = jnp.asarray(masks)

    def pack_w(w):  # torch (Cout, Cin, 1, K) -> (Cout, K*Cin), col = k*C + ci
        return jnp.transpose(w[:, :, 0, :], (0, 2, 1)).reshape(C, K * C) \
                  .astype(jnp.float32)

    w1m, w2m = pack_w(params['w1']), pack_w(params['w2'])
    b1 = params['b1'].reshape(C, 1).astype(jnp.float32)
    b2 = params['b2'].reshape(C, 1).astype(jnp.float32)

    kernel = functools.partial(_resblock_kernel, offsets=offsets)

    def rep_spec(shape):   # small replicated parameters (same block every step)
        return pl.BlockSpec(shape, lambda n, s: (0,) * len(shape))

    out = pl.pallas_call(
        kernel,
        out_shape=jax.ShapeDtypeStruct((N, C, HW), x_nchw.dtype),
        grid=(N, HW // S_BLK),
        in_specs=[
            pl.BlockSpec((None, C, S_BLK), lambda n, s: (n, 0, s)),
            rep_spec((C, 1)),            # BN scale
            rep_spec((C, 1)),            # BN shift
            rep_spec((C, K * C)),        # conv1 weights
            rep_spec((C, 1)),            # conv1 bias
            rep_spec((C, K * C)),        # conv2 weights
            rep_spec((C, 1)),            # conv2 bias
            rep_spec((K, S_BLK)),        # tap masks
        ],
        out_specs=pl.BlockSpec((None, C, S_BLK), lambda n, s: (n, 0, s)),
        compiler_params=pltpu.CompilerParams(
            dimension_semantics=("parallel", "parallel"),
            vmem_limit_bytes=64 * 1024 * 1024),
    )(x_flat, scale, shift, w1m, b1, w2m, b2, masks)

    return out.reshape(N, C, H, W)


def resblock_reference(x, params, *, kernel_size, dilation):
    """Pure-JAX reference mirroring torch semantics (NCHW)."""
    C = x.shape[1]
    mean = jnp.mean(x, axis=(0, 2, 3), keepdims=True)
    var = jnp.mean((x - mean) ** 2, axis=(0, 2, 3), keepdims=True)
    xn = (params['gamma'].reshape(1, C, 1, 1) * (x - mean)
          / jnp.sqrt(var + BN_EPS) + params['beta'].reshape(1, C, 1, 1))

    def conv(h, w, b):
        y = lax.conv_general_dilated(
            h, w, window_strides=(1, 1),
            padding=[(0, 0), (dilation, dilation)],
            rhs_dilation=(1, dilation),
            dimension_numbers=('NCHW', 'OIHW', 'NCHW'))
        return y + b.reshape(1, C, 1, 1)

    out = jax.nn.relu(conv(xn, params['w1'], params['b1']))
    out = conv(out, params['w2'], params['b2']) + xn
    return jax.nn.relu(out)


if __name__ == "__main__":
    n_filters, kernel_size, dilation = 4, 3, 2
    N, H, W = 2, 8, 16

    key = jax.random.PRNGKey(0)
    ks = jax.random.split(key, 8)
    x = jax.random.normal(ks[0], (N, n_filters, H, W), jnp.float32)
    params = dict(
        w1=0.3 * jax.random.normal(ks[1], (n_filters, n_filters, 1, kernel_size), jnp.float32),
        b1=0.1 * jax.random.normal(ks[2], (n_filters,), jnp.float32),
        w2=0.3 * jax.random.normal(ks[3], (n_filters, n_filters, 1, kernel_size), jnp.float32),
        b2=0.1 * jax.random.normal(ks[4], (n_filters,), jnp.float32),
        gamma=1.0 + 0.1 * jax.random.normal(ks[5], (n_filters,), jnp.float32),
        beta=0.1 * jax.random.normal(ks[6], (n_filters,), jnp.float32),
    )

    out = jax.block_until_ready(
        resblock_forward(x, params, kernel_size=kernel_size, dilation=dilation))
    ref = jax.block_until_ready(
        resblock_reference(x, params, kernel_size=kernel_size, dilation=dilation))

    assert out.shape == x.shape, (out.shape, x.shape)
    max_err = float(jnp.max(jnp.abs(out - ref)))
    if max_err < 1e-4:
        print("KERNEL_OK")
    else:
        print("MISMATCH max_abs_err=", max_err)
</pallas_src>

<mosaic_0001>
module attributes {stable_mosaic.version = 11 : i64} {
  func.func @_resblock_kernel(%arg0: i32, %arg1: i32, %arg2: memref<1x4x128xf32, #tpu.memory_space<vmem>>, %arg3: memref<4x1xf32, #tpu.memory_space<vmem>>, %arg4: memref<4x1xf32, #tpu.memory_space<vmem>>, %arg5: memref<4x12xf32, #tpu.memory_space<vmem>>, %arg6: memref<4x1xf32, #tpu.memory_space<vmem>>, %arg7: memref<4x12xf32, #tpu.memory_space<vmem>>, %arg8: memref<4x1xf32, #tpu.memory_space<vmem>>, %arg9: memref<3x128xf32, #tpu.memory_space<vmem>>, %arg10: memref<1x4x128xf32, #tpu.memory_space<vmem>>) attributes {dimension_semantics = [#tpu.dimension_semantics<parallel>, #tpu.dimension_semantics<parallel>], iteration_bounds = array<i64: 2, 1>, scalar_prefetch = 0 : i64, scratch_operands = 0 : i64, tpu.core_type = #tpu.core_type<tc>, window_params = [{transform_indices = @transform_0, window_bounds = array<i64: 1, 4, 128>}, {pipeline_mode = #tpu.pipeline_mode<synchronous>, transform_indices = @transform_1, window_bounds = array<i64: 4, 1>}, {pipeline_mode = #tpu.pipeline_mode<synchronous>, transform_indices = @transform_2, window_bounds = array<i64: 4, 1>}, {pipeline_mode = #tpu.pipeline_mode<synchronous>, transform_indices = @transform_3, window_bounds = array<i64: 4, 12>}, {pipeline_mode = #tpu.pipeline_mode<synchronous>, transform_indices = @transform_4, window_bounds = array<i64: 4, 1>}, {pipeline_mode = #tpu.pipeline_mode<synchronous>, transform_indices = @transform_5, window_bounds = array<i64: 4, 12>}, {pipeline_mode = #tpu.pipeline_mode<synchronous>, transform_indices = @transform_6, window_bounds = array<i64: 4, 1>}, {pipeline_mode = #tpu.pipeline_mode<synchronous>, transform_indices = @transform_7, window_bounds = array<i64: 3, 128>}, {transform_indices = @transform_8, window_bounds = array<i64: 1, 4, 128>}]} {
    %c0 = arith.constant 0 : index
    %c0_0 = arith.constant 0 : index
    %c0_1 = arith.constant 0 : index
    %0 = vector.load %arg2[%c0, %c0_0, %c0_1] : memref<1x4x128xf32, #tpu.memory_space<vmem>>, vector<1x4x128xf32>
    %1 = vector.shape_cast %0 : vector<1x4x128xf32> to vector<4x128xf32>
    %c0_2 = arith.constant 0 : index
    %c0_3 = arith.constant 0 : index
    %2 = vector.load %arg3[%c0_2, %c0_3] : memref<4x1xf32, #tpu.memory_space<vmem>>, vector<4x1xf32>
    %3 = vector.broadcast %2 : vector<4x1xf32> to vector<4x128xf32>
    %4 = arith.mulf %1, %3 : vector<4x128xf32>
    %c0_4 = arith.constant 0 : index
    %c0_5 = arith.constant 0 : index
    %5 = vector.load %arg4[%c0_4, %c0_5] : memref<4x1xf32, #tpu.memory_space<vmem>>, vector<4x1xf32>
    %6 = vector.broadcast %5 : vector<4x1xf32> to vector<4x128xf32>
    %7 = arith.addf %4, %6 : vector<4x128xf32>
    %cst = arith.constant 0.000000e+00 : f32
    %8 = vector.broadcast %cst : f32 to vector<4x128xf32>
    %9 = vector.extract_strided_slice %7 {offsets = [0, 126], sizes = [4, 2], strides = [1, 1]} : vector<4x128xf32> to vector<4x2xf32>
    %10 = vector.extract_strided_slice %7 {offsets = [0, 0], sizes = [4, 126], strides = [1, 1]} : vector<4x128xf32> to vector<4x126xf32>
    %11 = tpu.concatenate %9, %10 in 1 : vector<4x2xf32>, vector<4x126xf32> -> vector<4x128xf32>
    %c0_6 = arith.constant 0 : index
    %c0_7 = arith.constant 0 : index
    %12 = vector.load %arg9[%c0_6, %c0_7] : memref<3x128xf32, #tpu.memory_space<vmem>>, vector<1x128xf32>
    %13 = vector.broadcast %12 : vector<1x128xf32> to vector<4x128xf32>
    %14 = arith.mulf %11, %13 : vector<4x128xf32>
    %15 = vector.extract_strided_slice %14 {offsets = [0, 0], sizes = [1, 128], strides = [1, 1]} : vector<4x128xf32> to vector<1x128xf32>
    %c0_8 = arith.constant 0 : index
    %c0_9 = arith.constant 0 : index
    %16 = vector.load %arg5[%c0_8, %c0_9] : memref<4x12xf32, #tpu.memory_space<vmem>>, vector<4x1xf32>
    %17 = vector.broadcast %16 : vector<4x1xf32> to vector<4x128xf32>
    %18 = vector.broadcast %15 : vector<1x128xf32> to vector<4x128xf32>
    %19 = arith.mulf %17, %18 : vector<4x128xf32>
    %20 = arith.addf %8, %19 : vector<4x128xf32>
    %21 = vector.extract_strided_slice %14 {offsets = [1, 0], sizes = [1, 128], strides = [1, 1]} : vector<4x128xf32> to vector<1x128xf32>
    %c0_10 = arith.constant 0 : index
    %c1 = arith.constant 1 : index
    %22 = vector.load %arg5[%c0_10, %c1] : memref<4x12xf32, #tpu.memory_space<vmem>>, vector<4x1xf32>
    %23 = vector.broadcast %22 : vector<4x1xf32> to vector<4x128xf32>
    %24 = vector.broadcast %21 : vector<1x128xf32> to vector<4x128xf32>
    %25 = arith.mulf %23, %24 : vector<4x128xf32>
    %26 = arith.addf %20, %25 : vector<4x128xf32>
    %27 = vector.extract_strided_slice %14 {offsets = [2, 0], sizes = [1, 128], strides = [1, 1]} : vector<4x128xf32> to vector<1x128xf32>
    %c0_11 = arith.constant 0 : index
    %c2 = arith.constant 2 : index
    %28 = vector.load %arg5[%c0_11, %c2] : memref<4x12xf32, #tpu.memory_space<vmem>>, vector<4x1xf32>
    %29 = vector.broadcast %28 : vector<4x1xf32> to vector<4x128xf32>
    %30 = vector.broadcast %27 : vector<1x128xf32> to vector<4x128xf32>
    %31 = arith.mulf %29, %30 : vector<4x128xf32>
    %32 = arith.addf %26, %31 : vector<4x128xf32>
    %33 = vector.extract_strided_slice %14 {offsets = [3, 0], sizes = [1, 128], strides = [1, 1]} : vector<4x128xf32> to vector<1x128xf32>
    %c0_12 = arith.constant 0 : index
    %c3 = arith.constant 3 : index
    %34 = vector.load %arg5[%c0_12, %c3] : memref<4x12xf32, #tpu.memory_space<vmem>>, vector<4x1xf32>
    %35 = vector.broadcast %34 : vector<4x1xf32> to vector<4x128xf32>
    %36 = vector.broadcast %33 : vector<1x128xf32> to vector<4x128xf32>
    %37 = arith.mulf %35, %36 : vector<4x128xf32>
    %38 = arith.addf %32, %37 : vector<4x128xf32>
    %39 = vector.extract_strided_slice %7 {offsets = [0, 0], sizes = [1, 128], strides = [1, 1]} : vector<4x128xf32> to vector<1x128xf32>
    %c0_13 = arith.constant 0 : index
    %c4 = arith.constant 4 : index
    %40 = vector.load %arg5[%c0_13, %c4] : memref<4x12xf32, #tpu.memory_space<vmem>>, vector<4x1xf32>
    %41 = vector.broadcast %40 : vector<4x1xf32> to vector<4x128xf32>
    %42 = vector.broadcast %39 : vector<1x128xf32> to vector<4x128xf32>
    %43 = arith.mulf %41, %42 : vector<4x128xf32>
    %44 = arith.addf %38, %43 : vector<4x128xf32>
    %45 = vector.extract_strided_slice %7 {offsets = [1, 0], sizes = [1, 128], strides = [1, 1]} : vector<4x128xf32> to vector<1x128xf32>
    %c0_14 = arith.constant 0 : index
    %c5 = arith.constant 5 : index
    %46 = vector.load %arg5[%c0_14, %c5] : memref<4x12xf32, #tpu.memory_space<vmem>>, vector<4x1xf32>
    %47 = vector.broadcast %46 : vector<4x1xf32> to vector<4x128xf32>
    %48 = vector.broadcast %45 : vector<1x128xf32> to vector<4x128xf32>
    %49 = arith.mulf %47, %48 : vector<4x128xf32>
    %50 = arith.addf %44, %49 : vector<4x128xf32>
    %51 = vector.extract_strided_slice %7 {offsets = [2, 0], sizes = [1, 128], strides = [1, 1]} : vector<4x128xf32> to vector<1x128xf32>
    %c0_15 = arith.constant 0 : index
    %c6 = arith.constant 6 : index
    %52 = vector.load %arg5[%c0_15, %c6] : memref<4x12xf32, #tpu.memory_space<vmem>>, vector<4x1xf32>
    %53 = vector.broadcast %52 : vector<4x1xf32> to vector<4x128xf32>
    %54 = vector.broadcast %51 : vector<1x128xf32> to vector<4x128xf32>
    %55 = arith.mulf %53, %54 : vector<4x128xf32>
    %56 = arith.addf %50, %55 : vector<4x128xf32>
    %57 = vector.extract_strided_slice %7 {offsets = [3, 0], sizes = [1, 128], strides = [1, 1]} : vector<4x128xf32> to vector<1x128xf32>
    %c0_16 = arith.constant 0 : index
    %c7 = arith.constant 7 : index
    %58 = vector.load %arg5[%c0_16, %c7] : memref<4x12xf32, #tpu.memory_space<vmem>>, vector<4x1xf32>
    %59 = vector.broadcast %58 : vector<4x1xf32> to vector<4x128xf32>
    %60 = vector.broadcast %57 : vector<1x128xf32> to vector<4x128xf32>
    %61 = arith.mulf %59, %60 : vector<4x128xf32>
    %62 = arith.addf %56, %61 : vector<4x128xf32>
    %63 = vector.extract_strided_slice %7 {offsets = [0, 2], sizes = [4, 126], strides = [1, 1]} : vector<4x128xf32> to vector<4x126xf32>
    %64 = vector.extract_strided_slice %7 {offsets = [0, 0], sizes = [4, 2], strides = [1, 1]} : vector<4x128xf32> to vector<4x2xf32>
    %65 = tpu.concatenate %63, %64 in 1 : vector<4x126xf32>, vector<4x2xf32> -> vector<4x128xf32>
    %c2_17 = arith.constant 2 : index
    %c0_18 = arith.constant 0 : index
    %66 = vector.load %arg9[%c2_17, %c0_18] : memref<3x128xf32, #tpu.memory_space<vmem>>, vector<1x128xf32>
    %67 = vector.broadcast %66 : vector<1x128xf32> to vector<4x128xf32>
    %68 = arith.mulf %65, %67 : vector<4x128xf32>
    %69 = vector.extract_strided_slice %68 {offsets = [0, 0], sizes = [1, 128], strides = [1, 1]} : vector<4x128xf32> to vector<1x128xf32>
    %c0_19 = arith.constant 0 : index
    %c8 = arith.constant 8 : index
    %70 = vector.load %arg5[%c0_19, %c8] : memref<4x12xf32, #tpu.memory_space<vmem>>, vector<4x1xf32>
    %71 = vector.broadcast %70 : vector<4x1xf32> to vector<4x128xf32>
    %72 = vector.broadcast %69 : vector<1x128xf32> to vector<4x128xf32>
    %73 = arith.mulf %71, %72 : vector<4x128xf32>
    %74 = arith.addf %62, %73 : vector<4x128xf32>
    %75 = vector.extract_strided_slice %68 {offsets = [1, 0], sizes = [1, 128], strides = [1, 1]} : vector<4x128xf32> to vector<1x128xf32>
    %c0_20 = arith.constant 0 : index
    %c9 = arith.constant 9 : index
    %76 = vector.load %arg5[%c0_20, %c9] : memref<4x12xf32, #tpu.memory_space<vmem>>, vector<4x1xf32>
    %77 = vector.broadcast %76 : vector<4x1xf32> to vector<4x128xf32>
    %78 = vector.broadcast %75 : vector<1x128xf32> to vector<4x128xf32>
    %79 = arith.mulf %77, %78 : vector<4x128xf32>
    %80 = arith.addf %74, %79 : vector<4x128xf32>
    %81 = vector.extract_strided_slice %68 {offsets = [2, 0], sizes = [1, 128], strides = [1, 1]} : vector<4x128xf32> to vector<1x128xf32>
    %c0_21 = arith.constant 0 : index
    %c10 = arith.constant 10 : index
    %82 = vector.load %arg5[%c0_21, %c10] : memref<4x12xf32, #tpu.memory_space<vmem>>, vector<4x1xf32>
    %83 = vector.broadcast %82 : vector<4x1xf32> to vector<4x128xf32>
    %84 = vector.broadcast %81 : vector<1x128xf32> to vector<4x128xf32>
    %85 = arith.mulf %83, %84 : vector<4x128xf32>
    %86 = arith.addf %80, %85 : vector<4x128xf32>
    %87 = vector.extract_strided_slice %68 {offsets = [3, 0], sizes = [1, 128], strides = [1, 1]} : vector<4x128xf32> to vector<1x128xf32>
    %c0_22 = arith.constant 0 : index
    %c11 = arith.constant 11 : index
    %88 = vector.load %arg5[%c0_22, %c11] : memref<4x12xf32, #tpu.memory_space<vmem>>, vector<4x1xf32>
    %89 = vector.broadcast %88 : vector<4x1xf32> to vector<4x128xf32>
    %90 = vector.broadcast %87 : vector<1x128xf32> to vector<4x128xf32>
    %91 = arith.mulf %89, %90 : vector<4x128xf32>
    %92 = arith.addf %86, %91 : vector<4x128xf32>
    %c0_23 = arith.constant 0 : index
    %c0_24 = arith.constant 0 : index
    %93 = vector.load %arg6[%c0_23, %c0_24] : memref<4x1xf32, #tpu.memory_space<vmem>>, vector<4x1xf32>
    %94 = vector.broadcast %93 : vector<4x1xf32> to vector<4x128xf32>
    %95 = arith.addf %92, %94 : vector<4x128xf32>
    %cst_25 = arith.constant 0.000000e+00 : f32
    %96 = vector.broadcast %cst_25 : f32 to vector<4x128xf32>
    %97 = arith.maximumf %95, %96 : vector<4x128xf32>
    %cst_26 = arith.constant 0.000000e+00 : f32
    %98 = vector.broadcast %cst_26 : f32 to vector<4x128xf32>
    %99 = vector.extract_strided_slice %97 {offsets = [0, 126], sizes = [4, 2], strides = [1, 1]} : vector<4x128xf32> to vector<4x2xf32>
    %100 = vector.extract_strided_slice %97 {offsets = [0, 0], sizes = [4, 126], strides = [1, 1]} : vector<4x128xf32> to vector<4x126xf32>
    %101 = tpu.concatenate %99, %100 in 1 : vector<4x2xf32>, vector<4x126xf32> -> vector<4x128xf32>
    %c0_27 = arith.constant 0 : index
    %c0_28 = arith.constant 0 : index
    %102 = vector.load %arg9[%c0_27, %c0_28] : memref<3x128xf32, #tpu.memory_space<vmem>>, vector<1x128xf32>
    %103 = vector.broadcast %102 : vector<1x128xf32> to vector<4x128xf32>
    %104 = arith.mulf %101, %103 : vector<4x128xf32>
    %105 = vector.extract_strided_slice %104 {offsets = [0, 0], sizes = [1, 128], strides = [1, 1]} : vector<4x128xf32> to vector<1x128xf32>
    %c0_29 = arith.constant 0 : index
    %c0_30 = arith.constant 0 : index
    %106 = vector.load %arg7[%c0_29, %c0_30] : memref<4x12xf32, #tpu.memory_space<vmem>>, vector<4x1xf32>
    %107 = vector.broadcast %106 : vector<4x1xf32> to vector<4x128xf32>
    %108 = vector.broadcast %105 : vector<1x128xf32> to vector<4x128xf32>
    %109 = arith.mulf %107, %108 : vector<4x128xf32>
    %110 = arith.addf %98, %109 : vector<4x128xf32>
    %111 = vector.extract_strided_slice %104 {offsets = [1, 0], sizes = [1, 128], strides = [1, 1]} : vector<4x128xf32> to vector<1x128xf32>
    %c0_31 = arith.constant 0 : index
    %c1_32 = arith.constant 1 : index
    %112 = vector.load %arg7[%c0_31, %c1_32] : memref<4x12xf32, #tpu.memory_space<vmem>>, vector<4x1xf32>
    %113 = vector.broadcast %112 : vector<4x1xf32> to vector<4x128xf32>
    %114 = vector.broadcast %111 : vector<1x128xf32> to vector<4x128xf32>
    %115 = arith.mulf %113, %114 : vector<4x128xf32>
    %116 = arith.addf %110, %115 : vector<4x128xf32>
    %117 = vector.extract_strided_slice %104 {offsets = [2, 0], sizes = [1, 128], strides = [1, 1]} : vector<4x128xf32> to vector<1x128xf32>
    %c0_33 = arith.constant 0 : index
    %c2_34 = arith.constant 2 : index
    %118 = vector.load %arg7[%c0_33, %c2_34] : memref<4x12xf32, #tpu.memory_space<vmem>>, vector<4x1xf32>
    %119 = vector.broadcast %118 : vector<4x1xf32> to vector<4x128xf32>
    %120 = vector.broadcast %117 : vector<1x128xf32> to vector<4x128xf32>
    %121 = arith.mulf %119, %120 : vector<4x128xf32>
    %122 = arith.addf %116, %121 : vector<4x128xf32>
    %123 = vector.extract_strided_slice %104 {offsets = [3, 0], sizes = [1, 128], strides = [1, 1]} : vector<4x128xf32> to vector<1x128xf32>
    %c0_35 = arith.constant 0 : index
    %c3_36 = arith.constant 3 : index
    %124 = vector.load %arg7[%c0_35, %c3_36] : memref<4x12xf32, #tpu.memory_space<vmem>>, vector<4x1xf32>
    %125 = vector.broadcast %124 : vector<4x1xf32> to vector<4x128xf32>
    %126 = vector.broadcast %123 : vector<1x128xf32> to vector<4x128xf32>
    %127 = arith.mulf %125, %126 : vector<4x128xf32>
    %128 = arith.addf %122, %127 : vector<4x128xf32>
    %129 = vector.extract_strided_slice %97 {offsets = [0, 0], sizes = [1, 128], strides = [1, 1]} : vector<4x128xf32> to vector<1x128xf32>
    %c0_37 = arith.constant 0 : index
    %c4_38 = arith.constant 4 : index
    %130 = vector.load %arg7[%c0_37, %c4_38] : memref<4x12xf32, #tpu.memory_space<vmem>>, vector<4x1xf32>
    %131 = vector.broadcast %130 : vector<4x1xf32> to vector<4x128xf32>
    %132 = vector.broadcast %129 : vector<1x128xf32> to vector<4x128xf32>
    %133 = arith.mulf %131, %132 : vector<4x128xf32>
    %134 = arith.addf %128, %133 : vector<4x128xf32>
    %135 = vector.extract_strided_slice %97 {offsets = [1, 0], sizes = [1, 128], strides = [1, 1]} : vector<4x128xf32> to vector<1x128xf32>
    %c0_39 = arith.constant 0 : index
    %c5_40 = arith.constant 5 : index
    %136 = vector.load %arg7[%c0_39, %c5_40] : memref<4x12xf32, #tpu.memory_space<vmem>>, vector<4x1xf32>
    %137 = vector.broadcast %136 : vector<4x1xf32> to vector<4x128xf32>
    %138 = vector.broadcast %135 : vector<1x128xf32> to vector<4x128xf32>
    %139 = arith.mulf %137, %138 : vector<4x128xf32>
    %140 = arith.addf %134, %139 : vector<4x128xf32>
    %141 = vector.extract_strided_slice %97 {offsets = [2, 0], sizes = [1, 128], strides = [1, 1]} : vector<4x128xf32> to vector<1x128xf32>
    %c0_41 = arith.constant 0 : index
    %c6_42 = arith.constant 6 : index
    %142 = vector.load %arg7[%c0_41, %c6_42] : memref<4x12xf32, #tpu.memory_space<vmem>>, vector<4x1xf32>
    %143 = vector.broadcast %142 : vector<4x1xf32> to vector<4x128xf32>
    %144 = vector.broadcast %141 : vector<1x128xf32> to vector<4x128xf32>
    %145 = arith.mulf %143, %144 : vector<4x128xf32>
    %146 = arith.addf %140, %145 : vector<4x128xf32>
    %147 = vector.extract_strided_slice %97 {offsets = [3, 0], sizes = [1, 128], strides = [1, 1]} : vector<4x128xf32> to vector<1x128xf32>
    %c0_43 = arith.constant 0 : index
    %c7_44 = arith.constant 7 : index
    %148 = vector.load %arg7[%c0_43, %c7_44] : memref<4x12xf32, #tpu.memory_space<vmem>>, vector<4x1xf32>
    %149 = vector.broadcast %148 : vector<4x1xf32> to vector<4x128xf32>
    %150 = vector.broadcast %147 : vector<1x128xf32> to vector<4x128xf32>
    %151 = arith.mulf %149, %150 : vector<4x128xf32>
    %152 = arith.addf %146, %151 : vector<4x128xf32>
    %153 = vector.extract_strided_slice %97 {offsets = [0, 2], sizes = [4, 126], strides = [1, 1]} : vector<4x128xf32> to vector<4x126xf32>
    %154 = vector.extract_strided_slice %97 {offsets = [0, 0], sizes = [4, 2], strides = [1, 1]} : vector<4x128xf32> to vector<4x2xf32>
    %155 = tpu.concatenate %153, %154 in 1 : vector<4x126xf32>, vector<4x2xf32> -> vector<4x128xf32>
    %c2_45 = arith.constant 2 : index
    %c0_46 = arith.constant 0 : index
    %156 = vector.load %arg9[%c2_45, %c0_46] : memref<3x128xf32, #tpu.memory_space<vmem>>, vector<1x128xf32>
    %157 = vector.broadcast %156 : vector<1x128xf32> to vector<4x128xf32>
    %158 = arith.mulf %155, %157 : vector<4x128xf32>
    %159 = vector.extract_strided_slice %158 {offsets = [0, 0], sizes = [1, 128], strides = [1, 1]} : vector<4x128xf32> to vector<1x128xf32>
    %c0_47 = arith.constant 0 : index
    %c8_48 = arith.constant 8 : index
    %160 = vector.load %arg7[%c0_47, %c8_48] : memref<4x12xf32, #tpu.memory_space<vmem>>, vector<4x1xf32>
    %161 = vector.broadcast %160 : vector<4x1xf32> to vector<4x128xf32>
    %162 = vector.broadcast %159 : vector<1x128xf32> to vector<4x128xf32>
    %163 = arith.mulf %161, %162 : vector<4x128xf32>
    %164 = arith.addf %152, %163 : vector<4x128xf32>
    %165 = vector.extract_strided_slice %158 {offsets = [1, 0], sizes = [1, 128], strides = [1, 1]} : vector<4x128xf32> to vector<1x128xf32>
    %c0_49 = arith.constant 0 : index
    %c9_50 = arith.constant 9 : index
    %166 = vector.load %arg7[%c0_49, %c9_50] : memref<4x12xf32, #tpu.memory_space<vmem>>, vector<4x1xf32>
    %167 = vector.broadcast %166 : vector<4x1xf32> to vector<4x128xf32>
    %168 = vector.broadcast %165 : vector<1x128xf32> to vector<4x128xf32>
    %169 = arith.mulf %167, %168 : vector<4x128xf32>
    %170 = arith.addf %164, %169 : vector<4x128xf32>
    %171 = vector.extract_strided_slice %158 {offsets = [2, 0], sizes = [1, 128], strides = [1, 1]} : vector<4x128xf32> to vector<1x128xf32>
    %c0_51 = arith.constant 0 : index
    %c10_52 = arith.constant 10 : index
    %172 = vector.load %arg7[%c0_51, %c10_52] : memref<4x12xf32, #tpu.memory_space<vmem>>, vector<4x1xf32>
    %173 = vector.broadcast %172 : vector<4x1xf32> to vector<4x128xf32>
    %174 = vector.broadcast %171 : vector<1x128xf32> to vector<4x128xf32>
    %175 = arith.mulf %173, %174 : vector<4x128xf32>
    %176 = arith.addf %170, %175 : vector<4x128xf32>
    %177 = vector.extract_strided_slice %158 {offsets = [3, 0], sizes = [1, 128], strides = [1, 1]} : vector<4x128xf32> to vector<1x128xf32>
    %c0_53 = arith.constant 0 : index
    %c11_54 = arith.constant 11 : index
    %178 = vector.load %arg7[%c0_53, %c11_54] : memref<4x12xf32, #tpu.memory_space<vmem>>, vector<4x1xf32>
    %179 = vector.broadcast %178 : vector<4x1xf32> to vector<4x128xf32>
    %180 = vector.broadcast %177 : vector<1x128xf32> to vector<4x128xf32>
    %181 = arith.mulf %179, %180 : vector<4x128xf32>
    %182 = arith.addf %176, %181 : vector<4x128xf32>
    %c0_55 = arith.constant 0 : index
    %c0_56 = arith.constant 0 : index
    %183 = vector.load %arg8[%c0_55, %c0_56] : memref<4x1xf32, #tpu.memory_space<vmem>>, vector<4x1xf32>
    %184 = vector.broadcast %183 : vector<4x1xf32> to vector<4x128xf32>
    %185 = arith.addf %182, %184 : vector<4x128xf32>
    %186 = arith.addf %185, %7 : vector<4x128xf32>
    %cst_57 = arith.constant 0.000000e+00 : f32
    %187 = vector.broadcast %cst_57 : f32 to vector<4x128xf32>
    %188 = arith.maximumf %186, %187 : vector<4x128xf32>
    %c0_58 = arith.constant 0 : index
    %c0_59 = arith.constant 0 : index
    %c0_60 = arith.constant 0 : index
    %189 = vector.load %arg10[%c0_58, %c0_59, %c0_60] : memref<1x4x128xf32, #tpu.memory_space<vmem>>, vector<1x4x128xf32>
    %190 = vector.shape_cast %189 : vector<1x4x128xf32> to vector<4x128xf32>
    %191 = vector.shape_cast %188 : vector<4x128xf32> to vector<1x4x128xf32>
    tpu.vector_store %arg10[%c0_58, %c0_59, %c0_60], %191 {strides = array<i32>} : memref<1x4x128xf32, #tpu.memory_space<vmem>>, vector<1x4x128xf32>,
    return
  }
  func.func @transform_0(%arg0: i32, %arg1: i32) -> (i32, i32, i32) {
    %c0_i32 = arith.constant 0 : i32
    %c0_i32_0 = arith.constant 0 : i32
    return %arg0, %c0_i32, %arg1 : i32, i32, i32
  }
  func.func @transform_1(%arg0: i32, %arg1: i32) -> (i32, i32) {
    %c0_i32 = arith.constant 0 : i32
    %c0_i32_0 = arith.constant 0 : i32
    %c0_i32_1 = arith.constant 0 : i32
    return %c0_i32, %c0_i32_0 : i32, i32
  }
  func.func @transform_2(%arg0: i32, %arg1: i32) -> (i32, i32) {
    %c0_i32 = arith.constant 0 : i32
    %c0_i32_0 = arith.constant 0 : i32
    %c0_i32_1 = arith.constant 0 : i32
    return %c0_i32, %c0_i32_0 : i32, i32
  }
  func.func @transform_3(%arg0: i32, %arg1: i32) -> (i32, i32) {
    %c0_i32 = arith.constant 0 : i32
    %c0_i32_0 = arith.constant 0 : i32
    %c0_i32_1 = arith.constant 0 : i32
    return %c0_i32, %c0_i32_0 : i32, i32
  }
  func.func @transform_4(%arg0: i32, %arg1: i32) -> (i32, i32) {
    %c0_i32 = arith.constant 0 : i32
    %c0_i32_0 = arith.constant 0 : i32
    %c0_i32_1 = arith.constant 0 : i32
    return %c0_i32, %c0_i32_0 : i32, i32
  }
  func.func @transform_5(%arg0: i32, %arg1: i32) -> (i32, i32) {
    %c0_i32 = arith.constant 0 : i32
    %c0_i32_0 = arith.constant 0 : i32
    %c0_i32_1 = arith.constant 0 : i32
    return %c0_i32, %c0_i32_0 : i32, i32
  }
  func.func @transform_6(%arg0: i32, %arg1: i32) -> (i32, i32) {
    %c0_i32 = arith.constant 0 : i32
    %c0_i32_0 = arith.constant 0 : i32
    %c0_i32_1 = arith.constant 0 : i32
    return %c0_i32, %c0_i32_0 : i32, i32
  }
  func.func @transform_7(%arg0: i32, %arg1: i32) -> (i32, i32) {
    %c0_i32 = arith.constant 0 : i32
    %c0_i32_0 = arith.constant 0 : i32
    %c0_i32_1 = arith.constant 0 : i32
    return %c0_i32, %c0_i32_0 : i32, i32
  }
  func.func @transform_8(%arg0: i32, %arg1: i32) -> (i32, i32, i32) {
    %c0_i32 = arith.constant 0 : i32
    %c0_i32_0 = arith.constant 0 : i32
    return %arg0, %c0_i32, %arg1 : i32, i32, i32
  }
}

</mosaic_0001>

<llo_original>
// kernel: resblock_forward.1
$region0: #{resblock_forward.1}
  #allocation0 [shape = 'u32[]', space=smem, size = 0x4, offset = 0x4, fixed_abs, tag = 'smem constant byte address 0x4 - core index']
  #allocation1 [shape = 'u32[72,128]{1,0:T(1,128)}', space=vmem, size = 0x9000, scoped, tag = 'internal scratch']
  %s0 = inlined_call_operand.vmem [shape: f32[2,4,128], index: 0, kind: input, shape index: {}]
  %s1 = inlined_call_operand.vmem [shape: f32[4,1], index: 1, kind: input, shape index: {}]
  %s2 = inlined_call_operand.vmem [shape: f32[4,1], index: 2, kind: input, shape index: {}]
  %s3 = inlined_call_operand.vmem [shape: f32[4,12], index: 3, kind: input, shape index: {}]
  %s4 = inlined_call_operand.vmem [shape: f32[4,1], index: 4, kind: input, shape index: {}]
  %s5 = inlined_call_operand.vmem [shape: f32[4,12], index: 5, kind: input, shape index: {}]
  %s6 = inlined_call_operand.vmem [shape: f32[4,1], index: 6, kind: input, shape index: {}]
  %s7 = inlined_call_operand.vmem [shape: f32[3,128], index: 7, kind: input, shape index: {}]
  %s8 = inlined_call_operand.vmem [shape: f32[2,4,128], index: 8, kind: output, shape index: {}]
  %s9 = sld [smem:[#allocation0]]
  $region65: #{resblock_forward.1} parent=0
    _
  %s11 = ssub.s32 1, %s9
  %s12 = scalar_select 0, %s11, %s9
  loop: start=0, step=1, limit=4
  $region2: #{resblock_forward.1} parent=0 // loop_pre_header
    _
  $region3: #{resblock_forward.1} parent=0 // loop_header
    %s14 = sphi 0, %s18
    %p15 = scmp.ge.s32.totalorder %s14, 4
    %s21 = sphi 0, %s33
    %s22 = sphi 0, %s29
    %s23 = sphi 0, %s21
    %s24 = sphi 0, %s22
    %s25 = sphi 0, %s23
    %s26 = sphi 0, %s24
    %s38 = sphi 0, %s40
    %s41 = sphi 0, %s38
    %s42 = sphi 0, %s41
    %s58 = sphi 0, %s42
    %s62 = sphi 0, %s62
    %s64 = sphi 0, %s62
    %s65 = sphi 0, %s64
    %s79 = sphi 0, %s65
    %s83 = sphi 0, %s83
    %s85 = sphi 0, %s83
    %s86 = sphi 0, %s85
    %s100 = sphi 0, %s86
    %s104 = sphi 0, %s104
    %s106 = sphi 0, %s104
    %s107 = sphi 0, %s106
    %s121 = sphi 0, %s107
    %s125 = sphi 0, %s125
    %s127 = sphi 0, %s125
    %s128 = sphi 0, %s127
    %s142 = sphi 0, %s128
    %s146 = sphi 0, %s146
    %s148 = sphi 0, %s146
    %s149 = sphi 0, %s148
    %s163 = sphi 0, %s149
    %s167 = sphi 0, %s167
    %s169 = sphi 0, %s167
    %s170 = sphi 0, %s169
    %s184 = sphi 0, %s170
    %s188 = sphi 0, %s188
    %s190 = sphi 0, %s188
    %s191 = sphi 0, %s190
    %s205 = sphi 0, %s191
    %s213 = sphi 0, %s215
    %s216 = sphi 0, %s213
    %s217 = sphi 0, %s216
    %s233 = sphi 0, %s217
  $region4: #{resblock_forward.1} parent=0 // loop_header_branch
    %17 = sbr.rel (%p15) target = $region8
  $region5: #{resblock_forward.1} parent=0 // loop_body
    %s19 = ssub.s32 %s14, 1
    %s20 = ssub.s32 %s14, 2
    %s27 = sadd.s32 1, %s22
    %p28 = scmp.ge.s32.totalorder %s27, 1
    %s29 = scalar_select %p28, 0, %s27
    %s30 = sadd.s32 1, %s21
    %s31 = scalar_select %p28, %s30, %s21
    %p32 = scmp.ge.s32.totalorder %s31, 2
    %s33 = scalar_select %p32, 0, %s31
    %s34 = ssub.s32 %s21, %s33
    %s35 = ssub.s32 %s22, %s29
    %s36 = sor.u32 %s34, %s35
    %p37 = scmp.eq.s32.totalorder %s36, 0
    %s39 = sadd.s32 %s38, 1
    %s40 = scalar_select %p37, %s38, %s39
    %p43 = pneg %p37
    %p44 = scmp.eq.s32.totalorder %s14, 1
    %p45 = por %p43, %p44
    %p46 = scmp.ne.s32.totalorder %s38, %s41
    %p47 = scmp.eq.s32.totalorder %s14, 0
    %p48 = por %p46, %p47
    %p49 = scmp.ne.s32.totalorder %s38, %s41
    %p50 = scmp.eq.s32.totalorder %s19, 1
    %p51 = por %p49, %p50
    %p52 = scmp.ne.s32.totalorder %s41, %s42
    %p53 = scmp.eq.s32.totalorder %s19, 0
    %p54 = por %p52, %p53
    %p55 = scmp.ne.s32.totalorder %s41, %s42
    %p56 = scmp.eq.s32.totalorder %s20, 1
    %p57 = por %p55, %p56
    %p59 = scmp.ne.s32.totalorder %s42, %s58
    %p60 = scmp.eq.s32.totalorder %s20, 0
    %p61 = por %p59, %p60
    %s63 = sadd.s32 %s62, 1
    %p66 = scmp.eq.s32.totalorder %s14, 1
    %p67 = scmp.ne.s32.totalorder %s62, %s64
    %p68 = scmp.eq.s32.totalorder %s14, 0
    %p69 = por %p67, %p68
    %p70 = scmp.ne.s32.totalorder %s62, %s64
    %p71 = scmp.eq.s32.totalorder %s19, 1
    %p72 = por %p70, %p71
    %p73 = scmp.ne.s32.totalorder %s64, %s65
    %p74 = scmp.eq.s32.totalorder %s19, 0
    %p75 = por %p73, %p74
    %p76 = scmp.ne.s32.totalorder %s64, %s65
    %p77 = scmp.eq.s32.totalorder %s20, 1
    %p78 = por %p76, %p77
    %p80 = scmp.ne.s32.totalorder %s65, %s79
    %p81 = scmp.eq.s32.totalorder %s20, 0
    %p82 = por %p80, %p81
    %s84 = sadd.s32 %s83, 1
    %p87 = scmp.eq.s32.totalorder %s14, 1
    %p88 = scmp.ne.s32.totalorder %s83, %s85
    %p89 = scmp.eq.s32.totalorder %s14, 0
    %p90 = por %p88, %p89
    %p91 = scmp.ne.s32.totalorder %s83, %s85
    %p92 = scmp.eq.s32.totalorder %s19, 1
    %p93 = por %p91, %p92
    %p94 = scmp.ne.s32.totalorder %s85, %s86
    %p95 = scmp.eq.s32.totalorder %s19, 0
    %p96 = por %p94, %p95
    %p97 = scmp.ne.s32.totalorder %s85, %s86
    %p98 = scmp.eq.s32.totalorder %s20, 1
    %p99 = por %p97, %p98
    %p101 = scmp.ne.s32.totalorder %s86, %s100
    %p102 = scmp.eq.s32.totalorder %s20, 0
    %p103 = por %p101, %p102
    %s105 = sadd.s32 %s104, 1
    %p108 = scmp.eq.s32.totalorder %s14, 1
    %p109 = scmp.ne.s32.totalorder %s104, %s106
    %p110 = scmp.eq.s32.totalorder %s14, 0
    %p111 = por %p109, %p110
    %p112 = scmp.ne.s32.totalorder %s104, %s106
    %p113 = scmp.eq.s32.totalorder %s19, 1
    %p114 = por %p112, %p113
    %p115 = scmp.ne.s32.totalorder %s106, %s107
    %p116 = scmp.eq.s32.totalorder %s19, 0
    %p117 = por %p115, %p116
    %p118 = scmp.ne.s32.totalorder %s106, %s107
    %p119 = scmp.eq.s32.totalorder %s20, 1
    %p120 = por %p118, %p119
    %p122 = scmp.ne.s32.totalorder %s107, %s121
    %p123 = scmp.eq.s32.totalorder %s20, 0
    %p124 = por %p122, %p123
    %s126 = sadd.s32 %s125, 1
    %p129 = scmp.eq.s32.totalorder %s14, 1
    %p130 = scmp.ne.s32.totalorder %s125, %s127
    %p131 = scmp.eq.s32.totalorder %s14, 0
    %p132 = por %p130, %p131
    %p133 = scmp.ne.s32.totalorder %s125, %s127
    %p134 = scmp.eq.s32.totalorder %s19, 1
    %p135 = por %p133, %p134
    %p136 = scmp.ne.s32.totalorder %s127, %s128
    %p137 = scmp.eq.s32.totalorder %s19, 0
    %p138 = por %p136, %p137
    %p139 = scmp.ne.s32.totalorder %s127, %s128
    %p140 = scmp.eq.s32.totalorder %s20, 1
    %p141 = por %p139, %p140
    %p143 = scmp.ne.s32.totalorder %s128, %s142
    %p144 = scmp.eq.s32.totalorder %s20, 0
    %p145 = por %p143, %p144
    %s147 = sadd.s32 %s146, 1
    %p150 = scmp.eq.s32.totalorder %s14, 1
    %p151 = scmp.ne.s32.totalorder %s146, %s148
    %p152 = scmp.eq.s32.totalorder %s14, 0
    %p153 = por %p151, %p152
    %p154 = scmp.ne.s32.totalorder %s146, %s148
    %p155 = scmp.eq.s32.totalorder %s19, 1
    %p156 = por %p154, %p155
    %p157 = scmp.ne.s32.totalorder %s148, %s149
    %p158 = scmp.eq.s32.totalorder %s19, 0
    %p159 = por %p157, %p158
    %p160 = scmp.ne.s32.totalorder %s148, %s149
    %p161 = scmp.eq.s32.totalorder %s20, 1
    %p162 = por %p160, %p161
    %p164 = scmp.ne.s32.totalorder %s149, %s163
    %p165 = scmp.eq.s32.totalorder %s20, 0
    %p166 = por %p164, %p165
    %s168 = sadd.s32 %s167, 1
    %p171 = scmp.eq.s32.totalorder %s14, 1
    %p172 = scmp.ne.s32.totalorder %s167, %s169
    %p173 = scmp.eq.s32.totalorder %s14, 0
    %p174 = por %p172, %p173
    %p175 = scmp.ne.s32.totalorder %s167, %s169
    %p176 = scmp.eq.s32.totalorder %s19, 1
    %p177 = por %p175, %p176
    %p178 = scmp.ne.s32.totalorder %s169, %s170
    %p179 = scmp.eq.s32.totalorder %s19, 0
    %p180 = por %p178, %p179
    %p181 = scmp.ne.s32.totalorder %s169, %s170
    %p182 = scmp.eq.s32.totalorder %s20, 1
    %p183 = por %p181, %p182
    %p185 = scmp.ne.s32.totalorder %s170, %s184
    %p186 = scmp.eq.s32.totalorder %s20, 0
    %p187 = por %p185, %p186
    %s189 = sadd.s32 %s188, 1
    %p192 = scmp.eq.s32.totalorder %s14, 1
    %p193 = scmp.ne.s32.totalorder %s188, %s190
    %p194 = scmp.eq.s32.totalorder %s14, 0
    %p195 = por %p193, %p194
    %p196 = scmp.ne.s32.totalorder %s188, %s190
    %p197 = scmp.eq.s32.totalorder %s19, 1
    %p198 = por %p196, %p197
    %p199 = scmp.ne.s32.totalorder %s190, %s191
    %p200 = scmp.eq.s32.totalorder %s19, 0
    %p201 = por %p199, %p200
    %p202 = scmp.ne.s32.totalorder %s190, %s191
    %p203 = scmp.eq.s32.totalorder %s20, 1
    %p204 = por %p202, %p203
    %p206 = scmp.ne.s32.totalorder %s191, %s205
    %p207 = scmp.eq.s32.totalorder %s20, 0
    %p208 = por %p206, %p207
    %s209 = ssub.s32 %s21, %s33
    %s210 = ssub.s32 %s22, %s29
    %s211 = sor.u32 %s209, %s210
    %p212 = scmp.eq.s32.totalorder %s211, 0
    %s214 = sadd.s32 %s213, 1
    %s215 = scalar_select %p212, %s213, %s214
    %p218 = pneg %p212
    %p219 = scmp.eq.s32.totalorder %s14, 1
    %p220 = por %p218, %p219
    %p221 = scmp.ne.s32.totalorder %s213, %s216
    %p222 = scmp.eq.s32.totalorder %s14, 0
    %p223 = por %p221, %p222
    %p224 = scmp.ne.s32.totalorder %s213, %s216
    %p225 = scmp.eq.s32.totalorder %s19, 1
    %p226 = por %p224, %p225
    %p227 = scmp.ne.s32.totalorder %s216, %s217
    %p228 = scmp.eq.s32.totalorder %s19, 0
    %p229 = por %p227, %p228
    %p230 = scmp.ne.s32.totalorder %s216, %s217
    %p231 = scmp.eq.s32.totalorder %s20, 1
    %p232 = por %p230, %p231
    %p234 = scmp.ne.s32.totalorder %s217, %s233
    %p235 = scmp.eq.s32.totalorder %s20, 0
    %p236 = por %p234, %p235
    %p237 = scmp.le.s32.totalorder 1, %s14
    %p238 = scmp.lt.s32.totalorder %s14, 3
    %p239 = pnand %p237, %p238
    %p240 = pneg %p239
    // Predicated region
    $region9: #{resblock_forward.1} parent=5 // pred_check
      _
    $region10: #{resblock_forward.1} parent=5 // pred_check_branch
      %242 = sbr.rel (%p239) target = $region12
    $region11: #{resblock_forward.1} parent=5 // pred_region
      %s243 = ssub.s32 %s14, 1
      // Predicated region
      $region13: #{resblock_forward.1} parent=11 // pred_check
        %p244 = pneg %p75
      $region14: #{resblock_forward.1} parent=11 // pred_check_branch
        %246 = sbr.rel (%p244) target = $region16
      $region15: #{resblock_forward.1} parent=11 // pred_region
        _
      $region16: #{resblock_forward.1} parent=11 // pred_fallthru
        _
      // Predicated region
      $region17: #{resblock_forward.1} parent=11 // pred_check
        %p247 = pneg %p96
      $region18: #{resblock_forward.1} parent=11 // pred_check_branch
        %249 = sbr.rel (%p247) target = $region20
      $region19: #{resblock_forward.1} parent=11 // pred_region
        _
      $region20: #{resblock_forward.1} parent=11 // pred_fallthru
        _
      // Predicated region
      $region21: #{resblock_forward.1} parent=11 // pred_check
        %p250 = pneg %p117
      $region22: #{resblock_forward.1} parent=11 // pred_check_branch
        %252 = sbr.rel (%p250) target = $region24
      $region23: #{resblock_forward.1} parent=11 // pred_region
        _
      $region24: #{resblock_forward.1} parent=11 // pred_fallthru
        _
      // Predicated region
      $region25: #{resblock_forward.1} parent=11 // pred_check
        %p253 = pneg %p138
      $region26: #{resblock_forward.1} parent=11 // pred_check_branch
        %255 = sbr.rel (%p253) target = $region28
      $region27: #{resblock_forward.1} parent=11 // pred_region
        _
      $region28: #{resblock_forward.1} parent=11 // pred_fallthru
        _
      // Predicated region
      $region29: #{resblock_forward.1} parent=11 // pred_check
        %p256 = pneg %p159
      $region30: #{resblock_forward.1} parent=11 // pred_check_branch
        %258 = sbr.rel (%p256) target = $region32
      $region31: #{resblock_forward.1} parent=11 // pred_region
        _
      $region32: #{resblock_forward.1} parent=11 // pred_fallthru
        _
      // Predicated region
      $region33: #{resblock_forward.1} parent=11 // pred_check
        %p259 = pneg %p180
      $region34: #{resblock_forward.1} parent=11 // pred_check_branch
        %261 = sbr.rel (%p259) target = $region36
      $region35: #{resblock_forward.1} parent=11 // pred_region
        _
      $region36: #{resblock_forward.1} parent=11 // pred_fallthru
        _
      // Predicated region
      $region37: #{resblock_forward.1} parent=11 // pred_check
        %p262 = pneg %p201
      $region38: #{resblock_forward.1} parent=11 // pred_check_branch
        %264 = sbr.rel (%p262) target = $region40
      $region39: #{resblock_forward.1} parent=11 // pred_region
        _
      $region40: #{resblock_forward.1} parent=11 // pred_fallthru
        _
    $region12: #{resblock_forward.1} parent=5 // pred_fallthru
      _
    %p265 = scmp.lt.s32.totalorder %s14, 2
    // Predicated region
    $region41: #{resblock_forward.1} parent=5 // pred_check
      %p266 = pneg %p265
    $region42: #{resblock_forward.1} parent=5 // pred_check_branch
      %268 = sbr.rel (%p266) target = $region44
    $region43: #{resblock_forward.1} parent=5 // pred_region
      // Predicated region
      $region45: #{resblock_forward.1} parent=43 // pred_check
        %p269 = pneg %p48
      $region46: #{resblock_forward.1} parent=43 // pred_check_branch
        %271 = sbr.rel (%p269) target = $region48
      $region47: #{resblock_forward.1} parent=43 // pred_region
        %p272 = scmp.lt.s32.totalorder %s21, 1
        %s273 = scalar_select %p272, %s21, 1
        %p274 = scmp.lt.s32.totalorder %s22, 0
        %s275 = scalar_select %p274, %s22, 0
        %s276 = sadd.s32 %s275, %s273
        %s277 = smul.addr %s276, 4
        %s278 = scalar_lea.vmem %s0, %s277
      $region48: #{resblock_forward.1} parent=43 // pred_fallthru
        _
    $region44: #{resblock_forward.1} parent=5 // pred_fallthru
      _
    %p279 = scmp.le.s32.totalorder 1, %s14
    %p280 = scmp.lt.s32.totalorder %s14, 3
    %p281 = pnand %p279, %p280
    %p282 = pneg %p281
    // Predicated region
    $region49: #{resblock_forward.1} parent=5 // pred_check
      _
    $region50: #{resblock_forward.1} parent=5 // pred_check_branch
      %284 = sbr.rel (%p281) target = $region52
    $region51: #{resblock_forward.1} parent=5 // pred_region
      %s285 = ssub.s32 %s14, 1
      %p286 = scmp.lt.s32.totalorder %s23, 1
      %s287 = scalar_select %p286, %s23, 1
      %p288 = scmp.lt.s32.totalorder %s24, 0
      %s289 = scalar_select %p288, %s24, 0
      %s290 = sadd.s32 %s289, %s287
      %s291 = smul.addr %s290, 4
      %s292 = scalar_lea.vmem %s0, %s291
      %p293 = pneg %p54
      %p294 = pneg %p51
      %p295 = pneg %p75
      %p296 = pneg %p72
      %p297 = pneg %p96
      %p298 = pneg %p93
      %p299 = pneg %p117
      %p300 = pneg %p114
      %p301 = pneg %p138
      %p302 = pneg %p135
      %p303 = pneg %p159
      %p304 = pneg %p156
      %p305 = pneg %p180
      %p306 = pneg %p177
      %p307 = pneg %p201
      %p308 = pneg %p198
      %p309 = pneg %p229
      %p310 = pneg %p226
      %p311 = scmp.lt.s32.totalorder %s23, 1
      %s312 = scalar_select %p311, %s23, 1
      %p313 = scmp.lt.s32.totalorder %s24, 0
      %s314 = scalar_select %p313, %s24, 0
      %s315 = sadd.s32 %s314, %s312
      %s316 = smul.addr %s315, 4
      %s317 = scalar_lea.vmem %s8, %s316
      %p318 = scmp.lt.s32.totalorder %s23, 1
      %s319 = scalar_select %p318, %s23, 1
      %p320 = scmp.lt.s32.totalorder %s24, 0
      %s321 = scalar_select %p320, %s24, 0
      %s322 = sadd.s32 %s321, %s319
      %s323 = smul.addr %s322, 4
      %s324 = scalar_lea.vmem %s0, %s323
      %p325 = scmp.lt.s32.totalorder %s23, 1
      %s326 = scalar_select %p325, %s23, 1
      %p327 = scmp.lt.s32.totalorder %s24, 0
      %s328 = scalar_select %p327, %s24, 0
      %s329 = sadd.s32 %s328, %s326
      %s330 = smul.addr %s329, 4
      %s331 = scalar_lea.vmem %s8, %s330
      %v332 = vld [vmem:[%s324] sm:$0xf]
      %v333 = vld [vmem:[%s1] sm:$0xf]
      %335 = vset.pattern.permute.xlu0 0
      %336 = vperm.xlu0 %335, %v333
      %v337 = vpop.permute.xlu0 %336
      %v339 = vmul.f32 %v332, %v337
      %v340 = vld [vmem:[%s2] sm:$0xf]
      %342 = vset.pattern.permute.xlu0 0
      %343 = vperm.xlu0 %342, %v340
      %v344 = vpop.permute.xlu0 %343
      %v346 = vadd.f32 %v339, %v344
      %348 = vrot.lane.b32.xlu0 %v346, 2
      %v349 = vpop.permute.xlu0 %348
      %v351 = vld [vmem:[%s7] sm:$0x1]
      %v352 = vperm.slane %v351, 0
      %v353 = vmul.f32 %v349, %v352
      %v354 = vld [vmem:[%s3] sm:$0xf]
      %356 = vset.pattern.permute.xlu0 0
      %357 = vperm.xlu0 %356, %v354
      %v358 = vpop.permute.xlu0 %357
      %v360 = vperm.slane %v353, 0
      %v361 = vmul.f32 %v358, %v360
      %v362 = vadd.f32 %v361, 0.0
      %363 = vset.pattern.permute.xlu0 1
      %364 = vperm.xlu0 %363, %v354
      %v365 = vpop.permute.xlu0 %364
      %v367 = vperm.slane %v353, 1
      %v368 = vmul.f32 %v365, %v367
      %v369 = vadd.f32 %v362, %v368
      %370 = vset.pattern.permute.xlu0 2
      %371 = vperm.xlu0 %370, %v354
      %v372 = vpop.permute.xlu0 %371
      %v374 = vperm.slane %v353, 2
      %v375 = vmul.f32 %v372, %v374
      %v376 = vadd.f32 %v369, %v375
      %377 = vset.pattern.permute.xlu0 3
      %378 = vperm.xlu0 %377, %v354
      %v379 = vpop.permute.xlu0 %378
      %v381 = vperm.slane %v353, 3
      %v382 = vmul.f32 %v379, %v381
      %v383 = vadd.f32 %v376, %v382
      %384 = vset.pattern.permute.xlu0 4
      %385 = vperm.xlu0 %384, %v354
      %v386 = vpop.permute.xlu0 %385
      %v388 = vperm.slane %v346, 0
      %v389 = vmul.f32 %v386, %v388
      %v390 = vadd.f32 %v383, %v389
      %391 = vset.pattern.permute.xlu0 5
      %392 = vperm.xlu0 %391, %v354
      %v393 = vpop.permute.xlu0 %392
      %v395 = vperm.slane %v346, 1
      %v396 = vmul.f32 %v393, %v395
      %v397 = vadd.f32 %v390, %v396
      %398 = vset.pattern.permute.xlu0 6
      %399 = vperm.xlu0 %398, %v354
      %v400 = vpop.permute.xlu0 %399
      %v402 = vperm.slane %v346, 2
      %v403 = vmul.f32 %v400, %v402
      %v404 = vadd.f32 %v397, %v403
      %405 = vset.pattern.permute.xlu0 7
      %406 = vperm.xlu0 %405, %v354
      %v407 = vpop.permute.xlu0 %406
      %v409 = vperm.slane %v346, 3
      %v410 = vmul.f32 %v407, %v409
      %v411 = vadd.f32 %v404, %v410
      %412 = vrot.lane.b32.xlu0 %v346, 126
      %v413 = vpop.permute.xlu0 %412
      %v415 = vld [vmem:[%s7 + $0x2] sm:$0x1]
      %v416 = vperm.slane %v415, 0
      %v417 = vmul.f32 %v413, %v416
      %418 = vset.pattern.permute.xlu0 8
      %419 = vperm.xlu0 %418, %v354
      %v420 = vpop.permute.xlu0 %419
      %v422 = vperm.slane %v417, 0
      %v423 = vmul.f32 %v420, %v422
      %v424 = vadd.f32 %v411, %v423
      %425 = vset.pattern.permute.xlu0 9
      %426 = vperm.xlu0 %425, %v354
      %v427 = vpop.permute.xlu0 %426
      %v429 = vperm.slane %v417, 1
      %v430 = vmul.f32 %v427, %v429
      %v431 = vadd.f32 %v424, %v430
      %432 = vset.pattern.permute.xlu0 10
      %433 = vperm.xlu0 %432, %v354
      %v434 = vpop.permute.xlu0 %433
      %v436 = vperm.slane %v417, 2
      %v437 = vmul.f32 %v434, %v436
      %v438 = vadd.f32 %v431, %v437
      %439 = vset.pattern.permute.xlu0 11
      %440 = vperm.xlu0 %439, %v354
      %v441 = vpop.permute.xlu0 %440
      %v443 = vperm.slane %v417, 3
      %v444 = vmul.f32 %v441, %v443
      %v445 = vadd.f32 %v438, %v444
      %v446 = vld [vmem:[%s4] sm:$0xf]
      %448 = vset.pattern.permute.xlu0 0
      %449 = vperm.xlu0 %448, %v446
      %v450 = vpop.permute.xlu0 %449
      %v452 = vadd.f32 %v445, %v450
      %v453 = vmax.f32 %v452, 0.0
      %455 = vrot.lane.b32.xlu0 %v453, 2
      %v456 = vpop.permute.xlu0 %455
      %v458 = vmul.f32 %v456, %v352
      %v459 = vld [vmem:[%s5] sm:$0xf]
      %461 = vset.pattern.permute.xlu0 0
      %462 = vperm.xlu0 %461, %v459
      %v463 = vpop.permute.xlu0 %462
      %v465 = vperm.slane %v458, 0
      %v466 = vmul.f32 %v463, %v465
      %v467 = vadd.f32 %v466, 0.0
      %468 = vset.pattern.permute.xlu0 1
      %469 = vperm.xlu0 %468, %v459
      %v470 = vpop.permute.xlu0 %469
      %v472 = vperm.slane %v458, 1
      %v473 = vmul.f32 %v470, %v472
      %v474 = vadd.f32 %v467, %v473
      %475 = vset.pattern.permute.xlu0 2
      %476 = vperm.xlu0 %475, %v459
      %v477 = vpop.permute.xlu0 %476
      %v479 = vperm.slane %v458, 2
      %v480 = vmul.f32 %v477, %v479
      %v481 = vadd.f32 %v474, %v480
      %482 = vset.pattern.permute.xlu0 3
      %483 = vperm.xlu0 %482, %v459
      %v484 = vpop.permute.xlu0 %483
      %v486 = vperm.slane %v458, 3
      %v487 = vmul.f32 %v484, %v486
      %v488 = vadd.f32 %v481, %v487
      %489 = vset.pattern.permute.xlu0 4
      %490 = vperm.xlu0 %489, %v459
      %v491 = vpop.permute.xlu0 %490
      %v493 = vperm.slane %v453, 0
      %v494 = vmul.f32 %v491, %v493
      %v495 = vadd.f32 %v488, %v494
      %496 = vset.pattern.permute.xlu0 5
      %497 = vperm.xlu0 %496, %v459
      %v498 = vpop.permute.xlu0 %497
      %v500 = vperm.slane %v453, 1
      %v501 = vmul.f32 %v498, %v500
      %v502 = vadd.f32 %v495, %v501
      %503 = vset.pattern.permute.xlu0 6
      %504 = vperm.xlu0 %503, %v459
      %v505 = vpop.permute.xlu0 %504
      %v507 = vperm.slane %v453, 2
      %v508 = vmul.f32 %v505, %v507
      %v509 = vadd.f32 %v502, %v508
      %510 = vset.pattern.permute.xlu0 7
      %511 = vperm.xlu0 %510, %v459
      %v512 = vpop.permute.xlu0 %511
      %v514 = vperm.slane %v453, 3
      %v515 = vmul.f32 %v512, %v514
      %v516 = vadd.f32 %v509, %v515
      %517 = vrot.lane.b32.xlu0 %v453, 126
      %v518 = vpop.permute.xlu0 %517
      %v520 = vmul.f32 %v518, %v416
      %521 = vset.pattern.permute.xlu0 8
      %522 = vperm.xlu0 %521, %v459
      %v523 = vpop.permute.xlu0 %522
      %v525 = vperm.slane %v520, 0
      %v526 = vmul.f32 %v523, %v525
      %v527 = vadd.f32 %v516, %v526
      %528 = vset.pattern.permute.xlu0 9
      %529 = vperm.xlu0 %528, %v459
      %v530 = vpop.permute.xlu0 %529
      %v532 = vperm.slane %v520, 1
      %v533 = vmul.f32 %v530, %v532
      %v534 = vadd.f32 %v527, %v533
      %535 = vset.pattern.permute.xlu0 10
      %536 = vperm.xlu0 %535, %v459
      %v537 = vpop.permute.xlu0 %536
      %v539 = vperm.slane %v520, 2
      %v540 = vmul.f32 %v537, %v539
      %v541 = vadd.f32 %v534, %v540
      %542 = vset.pattern.permute.xlu0 11
      %543 = vperm.xlu0 %542, %v459
      %v544 = vpop.permute.xlu0 %543
      %v546 = vperm.slane %v520, 3
      %v547 = vmul.f32 %v544, %v546
      %v548 = vadd.f32 %v541, %v547
      %v549 = vld [vmem:[%s6] sm:$0xf]
      %551 = vset.pattern.permute.xlu0 0
      %552 = vperm.xlu0 %551, %v549
      %v553 = vpop.permute.xlu0 %552
      %v555 = vadd.f32 %v548, %v553
      %v556 = vadd.f32 %v555, %v346
      %v557 = vmax.f32 %v556, 0.0
      %558 = vst [vmem:[%s331] sm:$0xf] %v557
      %p559 = scmp.lt.s32.totalorder %s23, 1
      %s560 = scalar_select %p559, %s23, 1
      %p561 = scmp.lt.s32.totalorder %s24, 0
      %s562 = scalar_select %p561, %s24, 0
      %s563 = sadd.s32 %s562, %s560
      %s564 = smul.addr %s563, 4
      %s565 = scalar_lea.vmem %s8, %s564
      // Predicated region
      $region53: #{resblock_forward.1} parent=51 // pred_check
        %p566 = pneg %p226
      $region54: #{resblock_forward.1} parent=51 // pred_check_branch
        %568 = sbr.rel (%p566) target = $region56
      $region55: #{resblock_forward.1} parent=51 // pred_region
        _
      $region56: #{resblock_forward.1} parent=51 // pred_fallthru
        _
    $region52: #{resblock_forward.1} parent=5 // pred_fallthru
      _
    %p569 = scmp.le.s32.totalorder 2, %s14
    // Predicated region
    $region57: #{resblock_forward.1} parent=5 // pred_check
      %p570 = pneg %p569
    $region58: #{resblock_forward.1} parent=5 // pred_check_branch
      %572 = sbr.rel (%p570) target = $region60
    $region59: #{resblock_forward.1} parent=5 // pred_region
      %s573 = ssub.s32 %s14, 2
      // Predicated region
      $region61: #{resblock_forward.1} parent=59 // pred_check
        %p574 = pneg %p232
      $region62: #{resblock_forward.1} parent=59 // pred_check_branch
        %576 = sbr.rel (%p574) target = $region64
      $region63: #{resblock_forward.1} parent=59 // pred_region
        %p577 = scmp.lt.s32.totalorder %s25, 1
        %s578 = scalar_select %p577, %s25, 1
        %p579 = scmp.lt.s32.totalorder %s26, 0
        %s580 = scalar_select %p579, %s26, 0
        %s581 = sadd.s32 %s580, %s578
        %s582 = smul.addr %s581, 4
        %s583 = scalar_lea.vmem %s8, %s582
      $region64: #{resblock_forward.1} parent=59 // pred_fallthru
        _
    $region60: #{resblock_forward.1} parent=5 // pred_fallthru
      _
  $region6: #{resblock_forward.1} parent=0 // loop_footer
    %s18 = sadd.s32 1, %s14
  $region7: #{resblock_forward.1} parent=0 // loop_footer_branch
    %13 = sbr.rel target = $region3
  $region8: #{resblock_forward.1} parent=0 // loop_exit
    _

</llo_original>
